<compile_context>
chip_gen: v7x
topology: tpu7x:2x2x1
jax: 0.10.0
libtpu: 0.0.40
codegen_flags: <defaults>
</compile_context>

<pallas_src>
import jax
import jax.numpy as jnp
from jax.experimental import pallas as pl
from jax.experimental.pallas import tpu as pltpu

IN_FEATURES = 3
LANES = 128                      # samples packed per row (one full lane group)
ROW_WIDTH = LANES * IN_FEATURES  # 384 f32 per packed row


def _round_up(n, m):
    return ((n + m - 1) // m) * m


def linear_kernel(x_ref, wm_ref, b_ref, o_ref):
    """One grid step: (tbr, 384) @ (384, 128) + b -> (tbr, 128).

    x_ref : VMEM (tbr, 384)   128 samples per row, 3 features interleaved
    wm_ref: VMEM (384, 128)   kron(I_128, w) contraction matrix (resident)
    b_ref : SMEM (1,)         bias scalar
    o_ref : VMEM (tbr, 128)   one output per sample, lane-dense
    """
    acc = jnp.dot(x_ref[...], wm_ref[...], preferred_element_type=jnp.float32)
    o_ref[...] = (acc + b_ref[0]).astype(o_ref.dtype)


def _choose_row_tile(n_rows, max_rows=2048):
    # max_rows=2048 rows = 262,144 samples = ~3 MiB of x (+1 MiB out) per step:
    # amortizes per-step overhead on every TPU generation (incl. v7x).
    if n_rows <= 8:
        return n_rows                      # one block (dims == full array dims)
    # Keep >= 2 grid steps so v7x's two TensorCores can both get work.
    tbr = min(max_rows, _round_up(pl.cdiv(n_rows, 2), 8))
    return max(8, tbr)


def linear_pallas(x, w, b):
    """y = x @ w + b.   x: (batch, 3) f32, w: (3,) f32, b: (1,) f32 -> (batch, 1)."""
    batch, in_f = x.shape
    assert in_f == IN_FEATURES and w.shape == (in_f,) and b.shape == (1,)

    # Pack 128 samples per row: (batch, 3) -> (batch/128, 384).
    # When batch is already a multiple of 128 this is a zero-copy bitcast
    # reshape; only the ragged / tiny-batch case pays a single pad copy.
    padded = max(8 * LANES, _round_up(batch, LANES))
    if padded != batch:
        xp = jnp.zeros((padded, in_f), x.dtype).at[:batch, :].set(x)
    else:
        xp = x
    n_rows = padded // LANES
    x2 = xp.reshape(n_rows, ROW_WIDTH)

    # Expand the (3,) weight into the block-diagonal contraction matrix
    #   wm[3*j + k, j] = w[k]   so that   x2 @ wm  == per-sample dot(x, w).
    wm = jnp.kron(jnp.eye(LANES, dtype=x.dtype), w.reshape(in_f, 1))

    tbr = _choose_row_tile(n_rows)
    n_tiles = pl.cdiv(n_rows, tbr)

    bytes_accessed = x2.size * 4 + wm.size * 4 + n_rows * LANES * 4 + 4
    out2 = pl.pallas_call(
        linear_kernel,
        out_shape=jax.ShapeDtypeStruct((n_rows, LANES), x.dtype),
        grid=(n_tiles,),
        in_specs=[
            pl.BlockSpec((tbr, ROW_WIDTH), lambda i: (i, 0)),    # x tile
            pl.BlockSpec((ROW_WIDTH, LANES), lambda i: (0, 0)),  # wm, stays resident
            pl.BlockSpec(memory_space=pltpu.MemorySpace.SMEM),   # bias scalar
        ],
        out_specs=pl.BlockSpec((tbr, LANES), lambda i: (i, 0)),
        compiler_params=pltpu.CompilerParams(
            dimension_semantics=("parallel",),
            vmem_limit_bytes=32 * 1024 * 1024,
        ),
        cost_estimate=pl.CostEstimate(
            flops=2 * n_rows * ROW_WIDTH * LANES,
            transcendentals=0,
            bytes_accessed=bytes_accessed,
        ),
    )(x2, wm, b)

    # (n_rows, 128) is exactly the samples in order -> free bitcast back.
    y = out2.reshape(padded, 1)
    if padded != batch:
        y = y[:batch, :]   # drop pad rows (only in the ragged/tiny case)
    return y


class RegressionModelPallas:
    """JAX/Pallas equivalent of the PyTorch RegressionModel (Linear(3, 1))."""

    def __init__(self, key):
        k_w, k_b = jax.random.split(key)
        in_features = IN_FEATURES
        # torch.nn.Linear init: U(-1/sqrt(in), 1/sqrt(in))
        bound = 1.0 / jnp.sqrt(jnp.float32(in_features))
        self.w = jax.random.uniform(k_w, (in_features,), jnp.float32, -bound, bound)
        self.b = jax.random.uniform(k_b, (1,), jnp.float32, -bound, bound)
        # jit so the pack/unpack reshapes stay metadata-only and the tiny
        # pad / kron ops are compiled alongside the pallas_call.
        self._fwd = jax.jit(linear_pallas)

    def __call__(self, x):
        return self._fwd(x, self.w, self.b)


if __name__ == "__main__":
    key = jax.random.PRNGKey(0)
    k_param, k_x, k_x2 = jax.random.split(key, 3)

    model = RegressionModelPallas(k_param)

    # Small case (batch=8): exercises the padded/tiny path, single grid step.
    batch = 8
    x = jax.random.normal(k_x, (batch, 3), dtype=jnp.float32)
    y = jax.block_until_ready(model(x))
    y_ref = x @ model.w.reshape(3, 1) + model.b.reshape(1, 1)
    assert y.shape == (batch, 1), y.shape
    assert jnp.allclose(y, y_ref, atol=1e-4, rtol=1e-4), (y, y_ref)

    # Aligned case (batch=2048): zero-copy reshape path, multi-step grid.
    batch2 = 2048
    x2 = jax.random.normal(k_x2, (batch2, 3), dtype=jnp.float32)
    y2 = jax.block_until_ready(model(x2))
    y2_ref = x2 @ model.w.reshape(3, 1) + model.b.reshape(1, 1)
    assert y2.shape == (batch2, 1), y2.shape
    assert jnp.allclose(y2, y2_ref, atol=1e-4, rtol=1e-4)

    print("KERNEL_OK")
</pallas_src>

<mosaic_0001>
module attributes {stable_mosaic.version = 11 : i64} {
  func.func @linear_kernel(%arg0: i32, %arg1: memref<8x384xf32, #tpu.memory_space<vmem>>, %arg2: memref<384x128xf32, #tpu.memory_space<vmem>>, %arg3: memref<1xf32, #tpu.memory_space<smem>>, %arg4: memref<8x128xf32, #tpu.memory_space<vmem>>) attributes {dimension_semantics = [#tpu.dimension_semantics<parallel>], iteration_bounds = array<i64: 1>, scalar_prefetch = 0 : i64, scratch_operands = 0 : i64, tpu.core_type = #tpu.core_type<tc>, window_params = [{transform_indices = @transform_0, window_bounds = array<i64: 8, 384>}, {pipeline_mode = #tpu.pipeline_mode<synchronous>, transform_indices = @transform_1, window_bounds = array<i64: 384, 128>}, {transform_indices = @transform_2, window_bounds = array<i64: 1>}, {transform_indices = @transform_3, window_bounds = array<i64: 8, 128>}]} {
    %c0 = arith.constant 0 : index
    %c0_0 = arith.constant 0 : index
    %0 = vector.load %arg1[%c0, %c0_0] : memref<8x384xf32, #tpu.memory_space<vmem>>, vector<8x384xf32>
    %c0_1 = arith.constant 0 : index
    %c0_2 = arith.constant 0 : index
    %1 = vector.load %arg2[%c0_1, %c0_2] : memref<384x128xf32, #tpu.memory_space<vmem>>, vector<384x128xf32>
    %cst = arith.constant dense<0.000000e+00> : vector<8x128xf32>
    %2 = tpu.matmul %0, %1, %cst {dimension_numbers = #tpu.dot_dimension_numbers<[1], [0], [0], [1], [0, 0, 1, 1], [], []>} : vector<8x384xf32>, vector<384x128xf32>, vector<8x128xf32> -> vector<8x128xf32>
    %c0_3 = arith.constant 0 : index
    %3 = memref.load %arg3[%c0_3] : memref<1xf32, #tpu.memory_space<smem>>
    %4 = vector.broadcast %3 : f32 to vector<8x128xf32>
    %5 = arith.addf %2, %4 : vector<8x128xf32>
    %c0_4 = arith.constant 0 : index
    %c0_5 = arith.constant 0 : index
    %6 = vector.load %arg4[%c0_4, %c0_5] : memref<8x128xf32, #tpu.memory_space<vmem>>, vector<8x128xf32>
    tpu.vector_store %arg4[%c0_4, %c0_5], %5 {strides = array<i32>} : memref<8x128xf32, #tpu.memory_space<vmem>>, vector<8x128xf32>,
    return
  }
  func.func @transform_0(%arg0: i32) -> (i32, i32) {
    %c0_i32 = arith.constant 0 : i32
    %c0_i32_0 = arith.constant 0 : i32
    return %arg0, %c0_i32 : i32, i32
  }
  func.func @transform_1(%arg0: i32) -> (i32, i32) {
    %c0_i32 = arith.constant 0 : i32
    %c0_i32_0 = arith.constant 0 : i32
    %c0_i32_1 = arith.constant 0 : i32
    return %c0_i32, %c0_i32_0 : i32, i32
  }
  func.func @transform_2(%arg0: i32) -> i32 {
    %c0_i32 = arith.constant 0 : i32
    %c0_i32_0 = arith.constant 0 : i32
    return %c0_i32 : i32
  }
  func.func @transform_3(%arg0: i32) -> (i32, i32) {
    %c0_i32 = arith.constant 0 : i32
    %c0_i32_0 = arith.constant 0 : i32
    return %arg0, %c0_i32 : i32, i32
  }
}

</mosaic_0001>

<llo_original>
// kernel: linear_pallas.1
$region0: #{linear_pallas.1}
  #allocation0 [shape = 'u32[]', space=smem, size = 0x4, offset = 0x4, fixed_abs, tag = 'smem constant byte address 0x4 - core index']
  #allocation1 [shape = 'u32[144,128]{1,0:T(1,128)}', space=vmem, size = 0x12000, scoped, tag = 'internal scratch']
  #allocation2 [shape = 'f32[1]{0:T(128)S(6)}', space=smem, size = 0x200, scoped, tag = 'scoped memory for linear_pallas.1']
  %s0 = inlined_call_operand.vmem [shape: f32[8,384], index: 0, kind: input, shape index: {}]
  %s1 = inlined_call_operand.vmem [shape: f32[384,128], index: 1, kind: input, shape index: {}]
  %s2 = inlined_call_operand.<no memory space> [shape: f32[1], index: 2, kind: input, shape index: {}]
  %s3 = inlined_call_operand.vmem [shape: f32[8,128], index: 3, kind: output, shape index: {}]
  %s4 = sld [smem:[#allocation0]]
  $region22: #{linear_pallas.1} parent=0
    _
  %s6 = ssub.s32 1, %s4
  %s7 = scalar_select 0, %s6, %s4
  %8 = sst [smem:[#allocation2]] %s2
  // Predicated region
  $region2: #{linear_pallas.1} parent=0 // pred_check
    _
  $region3: #{linear_pallas.1} parent=0 // pred_check_branch
    %10 = sbr.rel (0) target = $region5
  $region4: #{linear_pallas.1} parent=0 // pred_region
    _
  $region5: #{linear_pallas.1} parent=0 // pred_fallthru
    _
  // Predicated region
  $region6: #{linear_pallas.1} parent=0 // pred_check
    _
  $region7: #{linear_pallas.1} parent=0 // pred_check_branch
    %12 = sbr.rel (0) target = $region9
  $region8: #{linear_pallas.1} parent=0 // pred_region
    _
  $region9: #{linear_pallas.1} parent=0 // pred_fallthru
    _
  // Predicated region
  $region10: #{linear_pallas.1} parent=0 // pred_check
    _
  $region11: #{linear_pallas.1} parent=0 // pred_check_branch
    %14 = sbr.rel (0) target = $region13
  $region12: #{linear_pallas.1} parent=0 // pred_region
    _
  $region13: #{linear_pallas.1} parent=0 // pred_fallthru
    _
  %v15 = vld [vmem:[%s0] sm:$0xff]
  %v16 = vld [vmem:[%s0 + $0x8] sm:$0xff]
  %v17 = vld [vmem:[%s0 + $0x10] sm:$0xff]
  %v18 = vld [vmem:[%s1] sm:$0xff]
  %v19 = vld [vmem:[%s1 + $0x8] sm:$0xff]
  %v20 = vld [vmem:[%s1 + $0x10] sm:$0xff]
  %v21 = vld [vmem:[%s1 + $0x18] sm:$0xff]
  %v22 = vld [vmem:[%s1 + $0x20] sm:$0xff]
  %v23 = vld [vmem:[%s1 + $0x28] sm:$0xff]
  %v24 = vld [vmem:[%s1 + $0x30] sm:$0xff]
  %v25 = vld [vmem:[%s1 + $0x38] sm:$0xff]
  %v26 = vld [vmem:[%s1 + $0x40] sm:$0xff]
  %v27 = vld [vmem:[%s1 + $0x48] sm:$0xff]
  %v28 = vld [vmem:[%s1 + $0x50] sm:$0xff]
  %v29 = vld [vmem:[%s1 + $0x58] sm:$0xff]
  %v30 = vld [vmem:[%s1 + $0x60] sm:$0xff]
  %v31 = vld [vmem:[%s1 + $0x68] sm:$0xff]
  %v32 = vld [vmem:[%s1 + $0x70] sm:$0xff]
  %v33 = vld [vmem:[%s1 + $0x78] sm:$0xff]
  %v34 = vld [vmem:[%s1 + $0x80] sm:$0xff]
  %v35 = vld [vmem:[%s1 + $0x88] sm:$0xff]
  %v36 = vld [vmem:[%s1 + $0x90] sm:$0xff]
  %v37 = vld [vmem:[%s1 + $0x98] sm:$0xff]
  %v38 = vld [vmem:[%s1 + $0xa0] sm:$0xff]
  %v39 = vld [vmem:[%s1 + $0xa8] sm:$0xff]
  %v40 = vld [vmem:[%s1 + $0xb0] sm:$0xff]
  %v41 = vld [vmem:[%s1 + $0xb8] sm:$0xff]
  %v42 = vld [vmem:[%s1 + $0xc0] sm:$0xff]
  %v43 = vld [vmem:[%s1 + $0xc8] sm:$0xff]
  %v44 = vld [vmem:[%s1 + $0xd0] sm:$0xff]
  %v45 = vld [vmem:[%s1 + $0xd8] sm:$0xff]
  %v46 = vld [vmem:[%s1 + $0xe0] sm:$0xff]
  %v47 = vld [vmem:[%s1 + $0xe8] sm:$0xff]
  %v48 = vld [vmem:[%s1 + $0xf0] sm:$0xff]
  %v49 = vld [vmem:[%s1 + $0xf8] sm:$0xff]
  %v50 = vld [vmem:[%s1 + $0x100] sm:$0xff]
  %v51 = vld [vmem:[%s1 + $0x108] sm:$0xff]
  %v52 = vld [vmem:[%s1 + $0x110] sm:$0xff]
  %v53 = vld [vmem:[%s1 + $0x118] sm:$0xff]
  %v54 = vld [vmem:[%s1 + $0x120] sm:$0xff]
  %v55 = vld [vmem:[%s1 + $0x128] sm:$0xff]
  %v56 = vld [vmem:[%s1 + $0x130] sm:$0xff]
  %v57 = vld [vmem:[%s1 + $0x138] sm:$0xff]
  %v58 = vld [vmem:[%s1 + $0x140] sm:$0xff]
  %v59 = vld [vmem:[%s1 + $0x148] sm:$0xff]
  %v60 = vld [vmem:[%s1 + $0x150] sm:$0xff]
  %v61 = vld [vmem:[%s1 + $0x158] sm:$0xff]
  %v62 = vld [vmem:[%s1 + $0x160] sm:$0xff]
  %v63 = vld [vmem:[%s1 + $0x168] sm:$0xff]
  %v64 = vld [vmem:[%s1 + $0x170] sm:$0xff]
  %v65 = vld [vmem:[%s1 + $0x178] sm:$0xff]
  %s66 = sld [smem:[#allocation2]]
  %v67 = vstv %s66
  %68 = vmatprep.subr.mxu0 0.0
  %69 = vmatpush1.msra.mxu0 %v18
  %70 = vmatprep.subr.mxu0 0.0
  %71 = vmatpush1.msra.mxu0 %v19
  %72 = vmatprep.subr.mxu0 0.0
  %73 = vmatpush1.msra.mxu0 %v20
  %74 = vmatprep.subr.mxu0 0.0
  %75 = vmatpush1.msra.mxu0 %v21
  %76 = vmatprep.subr.mxu0 0.0
  %77 = vmatpush1.msra.mxu0 %v22
  %78 = vmatprep.subr.mxu0 0.0
  %79 = vmatpush1.msra.mxu0 %v23
  %80 = vmatprep.subr.mxu0 0.0
  %81 = vmatpush1.msra.mxu0 %v24
  %82 = vmatprep.subr.mxu0 0.0
  %83 = vmatpush1.msra.mxu0 %v25
  %84 = vmatprep.subr.mxu0 0.0
  %85 = vmatpush1.msra.mxu0 %v26
  %86 = vmatprep.subr.mxu0 0.0
  %87 = vmatpush1.msra.mxu0 %v27
  %88 = vmatprep.subr.mxu0 0.0
  %89 = vmatpush1.msra.mxu0 %v28
  %90 = vmatprep.subr.mxu0 0.0
  %91 = vmatpush1.msra.mxu0 %v29
  %92 = vmatprep.subr.mxu0 0.0
  %93 = vmatpush1.msra.mxu0 %v30
  %94 = vmatprep.subr.mxu0 0.0
  %95 = vmatpush1.msra.mxu0 %v31
  %96 = vmatprep.subr.mxu0 0.0
  %97 = vmatpush1.msra.mxu0 %v32
  %98 = vmatprep.subr.mxu0 0.0
  %99 = vmatpush1.msra.mxu0 %v33
  %100 = vmatprep.subr.mxu0 0.0
  %101 = vmatpush1.msra.mxu0 %v34
  %102 = vmatprep.subr.mxu0 0.0
  %103 = vmatpush1.msra.mxu0 %v35
  %104 = vmatprep.subr.mxu0 0.0
  %105 = vmatpush1.msra.mxu0 %v36
  %106 = vmatprep.subr.mxu0 0.0
  %107 = vmatpush1.msra.mxu0 %v37
  %108 = vmatprep.subr.mxu0 0.0
  %109 = vmatpush1.msra.mxu0 %v38
  %110 = vmatprep.subr.mxu0 0.0
  %111 = vmatpush1.msra.mxu0 %v39
  %112 = vmatprep.subr.mxu0 0.0
  %113 = vmatpush1.msra.mxu0 %v40
  %114 = vmatprep.subr.mxu0 0.0
  %115 = vmatpush1.msra.mxu0 %v41
  %116 = vmatprep.subr.mxu0 0.0
  %117 = vmatpush1.msra.mxu0 %v42
  %118 = vmatprep.subr.mxu0 0.0
  %119 = vmatpush1.msra.mxu0 %v43
  %120 = vmatprep.subr.mxu0 0.0
  %121 = vmatpush1.msra.mxu0 %v44
  %122 = vmatprep.subr.mxu0 0.0
  %123 = vmatpush1.msra.mxu0 %v45
  %124 = vmatprep.subr.mxu0 0.0
  %125 = vmatpush1.msra.mxu0 %v46
  %126 = vmatprep.subr.mxu0 0.0
  %127 = vmatpush1.msra.mxu0 %v47
  %128 = vmatprep.subr.mxu0 0.0
  %129 = vmatpush1.msra.mxu0 %v48
  %130 = vmatprep.subr.mxu0 0.0
  %131 = vmatpush1.msra.mxu0 %v49
  %132 = vmatprep.mubr.f32.mxu0 %v16
  %133 = vmatmul.mubr.f32.gmra.mrb[0].mxu0 %v15
  %v134 = vpop.f32.mrb[0].mxu0
  %v135 = vadd.f32 %v67, %v134
  %v136 = vpop.f32.mrb[0].mxu0
  %137 = vdwg.mxu0
  %138 = vmatprep.subr.mxu0 0.0
  %139 = vmatpush1.msra.mxu0 %v50
  %140 = vmatprep.subr.mxu0 0.0
  %141 = vmatpush1.msra.mxu0 %v51
  %142 = vmatprep.subr.mxu0 0.0
  %143 = vmatpush1.msra.mxu0 %v52
  %144 = vmatprep.subr.mxu0 0.0
  %145 = vmatpush1.msra.mxu0 %v53
  %146 = vmatprep.subr.mxu0 0.0
  %147 = vmatpush1.msra.mxu0 %v54
  %148 = vmatprep.subr.mxu0 0.0
  %149 = vmatpush1.msra.mxu0 %v55
  %150 = vmatprep.subr.mxu0 0.0
  %151 = vmatpush1.msra.mxu0 %v56
  %152 = vmatprep.subr.mxu0 0.0
  %153 = vmatpush1.msra.mxu0 %v57
  %154 = vmatprep.subr.mxu0 0.0
  %155 = vmatpush1.msra.mxu0 %v58
  %156 = vmatprep.subr.mxu0 0.0
  %157 = vmatpush1.msra.mxu0 %v59
  %158 = vmatprep.subr.mxu0 0.0
  %159 = vmatpush1.msra.mxu0 %v60
  %160 = vmatprep.subr.mxu0 0.0
  %161 = vmatpush1.msra.mxu0 %v61
  %162 = vmatprep.subr.mxu0 0.0
  %163 = vmatpush1.msra.mxu0 %v62
  %164 = vmatprep.subr.mxu0 0.0
  %165 = vmatpush1.msra.mxu0 %v63
  %166 = vmatprep.subr.mxu0 0.0
  %167 = vmatpush1.msra.mxu0 %v64
  %168 = vmatprep.subr.mxu0 0.0
  %169 = vmatpush1.msra.mxu0 %v65
  %170 = vmatprep.subr.mxu0 0.0
  %171 = vmatpush1.msra.mxu0 0.0
  %172 = vmatprep.subr.mxu0 0.0
  %173 = vmatpush1.msra.mxu0 0.0
  %174 = vmatprep.subr.mxu0 0.0
  %175 = vmatpush1.msra.mxu0 0.0
  %176 = vmatprep.subr.mxu0 0.0
  %177 = vmatpush1.msra.mxu0 0.0
  %178 = vmatprep.subr.mxu0 0.0
  %179 = vmatpush1.msra.mxu0 0.0
  %180 = vmatprep.subr.mxu0 0.0
  %181 = vmatpush1.msra.mxu0 0.0
  %182 = vmatprep.subr.mxu0 0.0
  %183 = vmatpush1.msra.mxu0 0.0
  %184 = vmatprep.subr.mxu0 0.0
  %185 = vmatpush1.msra.mxu0 0.0
  %186 = vmatprep.subr.mxu0 0.0
  %187 = vmatpush1.msra.mxu0 0.0
  %188 = vmatprep.subr.mxu0 0.0
  %189 = vmatpush1.msra.mxu0 0.0
  %190 = vmatprep.subr.mxu0 0.0
  %191 = vmatpush1.msra.mxu0 0.0
  %192 = vmatprep.subr.mxu0 0.0
  %193 = vmatpush1.msra.mxu0 0.0
  %194 = vmatprep.subr.mxu0 0.0
  %195 = vmatpush1.msra.mxu0 0.0
  %196 = vmatprep.subr.mxu0 0.0
  %197 = vmatpush1.msra.mxu0 0.0
  %198 = vmatprep.subr.mxu0 0.0
  %199 = vmatpush1.msra.mxu0 0.0
  %200 = vmatprep.subr.mxu0 0.0
  %201 = vmatpush1.msra.mxu0 0.0
  %202 = vmatprep.mubr.f32.mxu0 0.0
  %203 = vmatmul.mubr.f32.gmra.mrb[0].mxu0 %v17
  %v204 = vpop.f32.mrb[0].mxu0
  %v205 = vadd.f32 %v135, %v204
  %v206 = vpop.f32.mrb[0].mxu0
  %207 = vdwg.mxu0
  %208 = vst [vmem:[%s3] sm:$0xff] %v205
  // Predicated region
  $region14: #{linear_pallas.1} parent=0 // pred_check
    _
  $region15: #{linear_pallas.1} parent=0 // pred_check_branch
    %210 = sbr.rel (0) target = $region17
  $region16: #{linear_pallas.1} parent=0 // pred_region
    _
  $region17: #{linear_pallas.1} parent=0 // pred_fallthru
    _
  // Predicated region
  $region18: #{linear_pallas.1} parent=0 // pred_check
    _
  $region19: #{linear_pallas.1} parent=0 // pred_check_branch
    %212 = sbr.rel (0) target = $region21
  $region20: #{linear_pallas.1} parent=0 // pred_region
    _
  $region21: #{linear_pallas.1} parent=0 // pred_fallthru
    _

</llo_original>
